<compile_context>
chip_gen: v7x
topology: tpu7x:2x2x1
jax: 0.10.0
libtpu: 0.0.40
codegen_flags: <defaults>
</compile_context>

<pallas_src>
import numpy as np
import jax
import jax.numpy as jnp
from jax.experimental import pallas as pl
from jax.experimental.pallas import tpu as pltpu


# ----------------------------------------------------------------------------
# Fused point-table layout constants
# ----------------------------------------------------------------------------
MAX_LEN = 64          # padded mesh vertex count (global max)
N_SUB = 32            # sub-sampled vertices
N_KP = 8              # keypoints (bbox_bottom / kp_bottom)
OFF_V = 0
OFF_SUB = OFF_V + MAX_LEN               # 64
OFF_BBOX = OFF_SUB + N_SUB              # 96
OFF_KP = OFF_BBOX + N_KP                # 104
N_USED = OFF_KP + N_KP                  # 112
LANE = 128                              # fused point axis padded to one full lane width


def _round_up(x, m):
    return ((x + m - 1) // m) * m


# ----------------------------------------------------------------------------
# Pallas kernel:
#   axis-angle -> quaternion -> 3x3 rotation matrix, in-kernel object gather,
#   rotation of the lane-dense fused point slab, direct lane-dense row stores.
# ----------------------------------------------------------------------------
def _fused_rot_kernel(aa_ref, idx_ref, table_ref, out_ref):
    """
    aa_ref    : (TB, 3)            axis-angle per batch element         (VMEM)
    idx_ref   : (TB, 1) int32      object index per batch element       (VMEM)
    table_ref : (3, n_obj, 128)    coordinate-major canonical point table, VMEM-resident
    out_ref   : (3, TB, 128)       rotated, gathered slab
    """
    TB = aa_ref.shape[0]
    lanes = out_ref.shape[-1]
    n_obj = table_ref.shape[1]

    # --- axis-angle -> unit quaternion (w, x, y, z), pytorch3d semantics ------
    aa = aa_ref[...]                                          # (TB, 3)
    ax = aa[:, 0:1]
    ay = aa[:, 1:2]
    az = aa[:, 2:3]
    sq = ax * ax + ay * ay + az * az                          # (TB, 1)
    angle = jnp.sqrt(sq)
    half = 0.5 * angle
    small = angle < 1e-6
    safe = jnp.where(small, jnp.ones_like(angle), angle)
    # Taylor expansion of sin(x/2)/x near 0: 0.5 - x^2 / 48
    s = jnp.where(small, 0.5 - sq * (1.0 / 48.0), jnp.sin(half) / safe)
    w = jnp.cos(half)                                         # (TB, 1)
    qx = ax * s
    qy = ay * s
    qz = az * s

    # --- quaternion -> rotation matrix entries (all narrow (TB,1) ops) --------
    xx = qx * qx; yy = qy * qy; zz = qz * qz
    xy = qx * qy; xz = qx * qz; yz = qy * qz
    wx = w * qx;  wy = w * qy;  wz = w * qz
    r00 = 1.0 - 2.0 * (yy + zz); r01 = 2.0 * (xy - wz);       r02 = 2.0 * (xz + wy)
    r10 = 2.0 * (xy + wz);       r11 = 1.0 - 2.0 * (xx + zz); r12 = 2.0 * (yz - wx)
    r20 = 2.0 * (xz - wy);       r21 = 2.0 * (yz + wx);       r22 = 1.0 - 2.0 * (xx + yy)

    # --- in-kernel per-sample object gather from the VMEM-resident table ------
    # n_obj is a small trace-time constant, so an unrolled select chain is cheap and
    # lowers to plain broadcasts + vselects.  Lane-broadcast masks are hoisted once
    # (JAX does not CSE broadcast_in_dim).
    # TODO(synk): for large object catalogs, replace this select chain with a
    #             scalar-prefetch / DMA row gather.
    idx = idx_ref[...]                                        # (TB, 1) int32
    masks = [jnp.broadcast_to(idx == o, (TB, lanes)) for o in range(1, n_obj)]

    def gather_coord(c):
        res = jnp.broadcast_to(table_ref[c, 0:1, :], (TB, lanes))
        for o in range(1, n_obj):
            row = jnp.broadcast_to(table_ref[c, o:o + 1, :], (TB, lanes))
            res = jnp.where(masks[o - 1], row, res)
        return res

    px = gather_coord(0)                                      # (TB, 128)
    py = gather_coord(1)
    pz = gather_coord(2)

    # --- rotate: each output row is 3 broadcast-mul + 2 add (lane-dense store) -
    out_ref[0] = r00 * px + r01 * py + r02 * pz
    out_ref[1] = r10 * px + r11 * py + r12 * pz
    out_ref[2] = r20 * px + r21 * py + r22 * pz


def rotate_points_fused(aa_pad: jax.Array, idx_pad: jax.Array, table: jax.Array,
                        *, tb: int) -> jax.Array:
    """aa_pad: (B_pad, 3); idx_pad: (B_pad, 1) int32; table: (3, n_obj, 128).
    Returns the rotated, gathered slab (3, B_pad, 128)."""
    b_pad = aa_pad.shape[0]
    n_obj = table.shape[1]
    assert b_pad % tb == 0
    grid = (b_pad // tb,)
    return pl.pallas_call(
        _fused_rot_kernel,
        out_shape=jax.ShapeDtypeStruct((3, b_pad, LANE), jnp.float32),
        grid_spec=pltpu.PrefetchScalarGridSpec(
            num_scalar_prefetch=0,
            grid=grid,
            in_specs=[
                # (TB, 3) axis-angle block.  NOTE: pads to 128 lanes in VMEM; accepted
                # (payload is 12 B/sample and B is usually modest).
                pl.BlockSpec((tb, 3), lambda i: (i, 0)),
                # (TB, 1) int32 object index block (~4 B/sample of HBM traffic).
                pl.BlockSpec((tb, 1), lambda i: (i, 0)),
                # Whole canonical table each step -> constant block index -> stays
                # resident in VMEM (no per-step re-DMA).
                pl.BlockSpec((3, n_obj, LANE), lambda i: (0, 0, 0)),
            ],
            out_specs=pl.BlockSpec((3, tb, LANE), lambda i: (0, i, 0)),
        ),
        compiler_params=pltpu.CompilerParams(
            dimension_semantics=("parallel",)),          # shards blocks across v7x's 2 TCs
    )(aa_pad, idx_pad, table)


# ----------------------------------------------------------------------------
# Synthetic object tensors (stands in for construct_obj_tensors; no file I/O)
# ----------------------------------------------------------------------------
def build_synthetic_obj_tensors():
    rng = np.random.RandomState(1)
    names = ["box1", "cup2", "mug3"]
    n_obj = len(names)
    n_faces = 96

    v_len = np.array([64, 48, 56], dtype=np.int32)
    f_len = np.array([96, 80, 88], dtype=np.int32)

    v = rng.randn(n_obj, MAX_LEN, 3).astype(np.float32)
    mask = np.zeros((n_obj, MAX_LEN), dtype=np.float32)
    for i, vl in enumerate(v_len):
        v[i, vl:] = 0.0
        mask[i, :vl] = 1.0
    v_sub = rng.randn(n_obj, N_SUB, 3).astype(np.float32)
    f = rng.randint(0, MAX_LEN, size=(n_obj, n_faces, 3)).astype(np.int32)
    kps = rng.randn(n_obj, N_KP, 3).astype(np.float32)

    # Fused, lane-dense, coordinate-major point table built ONCE at construction time:
    #   lanes [0:64)    = padded mesh vertices v
    #   lanes [64:96)   = v_sub
    #   lanes [96:104)  = bbox_bottom
    #   lanes [104:112) = kp_bottom  (duplicate of bbox_bottom, mirroring construct_obj)
    #   lanes [112:128) = zero padding (lane-dense 128-wide stores in the kernel)
    cat = np.zeros((n_obj, LANE, 3), dtype=np.float32)
    cat[:, OFF_V:OFF_V + MAX_LEN] = v
    cat[:, OFF_SUB:OFF_SUB + N_SUB] = v_sub
    cat[:, OFF_BBOX:OFF_BBOX + N_KP] = kps
    cat[:, OFF_KP:OFF_KP + N_KP] = kps
    points_cat = np.ascontiguousarray(np.transpose(cat, (2, 0, 1)))   # (3, n_obj, 128)

    return {
        "names": names,
        "v": jnp.asarray(v),
        "v_sub": jnp.asarray(v_sub),
        "v_len": v_len,                            # host-side (CPU bookkeeping, max_len)
        "v_len_jnp": jnp.asarray(v_len),
        "f": jnp.asarray(f),
        "f_len": f_len,
        "f_len_jnp": jnp.asarray(f_len),
        "mask": jnp.asarray(mask),
        "bbox_bottom": jnp.asarray(kps),
        "kp_bottom": jnp.asarray(kps.copy()),
        "points_cat": jnp.asarray(points_cat),     # fused kernel table
    }


class RigidTensors:
    def __init__(self):
        self.obj_tensors = build_synthetic_obj_tensors()
        # jit the whole JAX section of forward_batch (gather + pallas_call + output slices)
        # so one executable is dispatched per call.
        self._fwd = jax.jit(self._forward_impl, static_argnames=("fwd_meshes", "max_len"))

    def forward(self, global_orient, query_names, fwd_meshes=False):
        return self.forward_batch(global_orient, query_names, fwd_meshes)

    def forward_batch(self, global_orient, query_names, fwd_meshes):
        B = global_orient.shape[0]
        assert global_orient.shape == (B, 3)
        assert len(query_names) == B
        names = self.obj_tensors["names"]
        # query_names are host strings -> indices are host constants
        obj_idx_np = np.array([names.index(n) for n in query_names], dtype=np.int32)
        max_len = int(self.obj_tensors["v_len"][obj_idx_np].max()) if fwd_meshes else 0
        return self._fwd(jnp.asarray(global_orient, jnp.float32),
                         jnp.asarray(obj_idx_np),
                         fwd_meshes=fwd_meshes, max_len=max_len)

    # Everything inside here runs under jax.jit.
    def _forward_impl(self, global_orient, obj_idx, *, fwd_meshes, max_len):
        B = global_orient.shape[0]
        TB = min(512, _round_up(B, 8))          # >=8 sublanes, pipeline-friendly at large B
        B_pad = _round_up(B, TB)

        aa = global_orient
        idx = obj_idx.astype(jnp.int32).reshape(B, 1)
        if B_pad > B:
            # padded rows: identity rotation of object 0; sliced off below
            aa = jnp.pad(aa, ((0, B_pad - B), (0, 0)))
            idx = jnp.pad(idx, ((0, B_pad - B), (0, 0)))

        # ONE fused Pallas launch: in-kernel gather + aa->R + rotation of v|v_sub|bbox|kp.
        rot = rotate_points_fused(aa, idx, self.obj_tensors["points_cat"], tb=TB)

        # Keep the slab coordinate-major; transpose only the small consumer slices.
        def take(off, n):
            return jnp.transpose(rot[:, :B, off:off + n], (1, 2, 0))   # (B, n, 3)

        out = {}
        if fwd_meshes:
            out["v"] = take(OFF_V, max_len)
            out["v_sub"] = take(OFF_SUB, N_SUB)
            out["v_len"] = self.obj_tensors["v_len_jnp"][obj_idx]
            out["f"] = self.obj_tensors["f"][obj_idx]
            out["f_len"] = self.obj_tensors["f_len_jnp"][obj_idx]
            out["mask"] = self.obj_tensors["mask"][obj_idx][:, :max_len]
        out["bbox3d"] = take(OFF_BBOX, N_KP)
        out["kp3d"] = take(OFF_KP, N_KP)
        return out


# ----------------------------------------------------------------------------
# Pure-JAX reference (for correctness check only)
# ----------------------------------------------------------------------------
def _aa_to_quat_ref(aa):
    angles = jnp.linalg.norm(aa, axis=-1, keepdims=True)
    half = 0.5 * angles
    small = jnp.abs(angles) < 1e-6
    s = jnp.where(small, 0.5 - angles * angles / 48.0,
                  jnp.sin(half) / jnp.where(small, 1.0, angles))
    return jnp.concatenate([jnp.cos(half), aa * s], axis=-1)


def _quat_apply_ref(q, p):
    w = q[:, None, :1]
    qv = q[:, None, 1:]
    t = 2.0 * jnp.cross(qv, p)
    return p + w * t + jnp.cross(qv, t)


# ----------------------------------------------------------------------------
if __name__ == "__main__":
    key = jax.random.PRNGKey(0)
    B = 4
    global_orient = jax.random.uniform(key, (B, 3), jnp.float32, -1.5, 1.5)
    # exercise the small-angle (Taylor) branch with one identity rotation
    global_orient = global_orient.at[0].set(0.0)
    query_names = ["cup2", "box1", "cup2", "mug3"]

    model = RigidTensors()
    out = model.forward(global_orient, query_names, fwd_meshes=True)
    out = jax.block_until_ready(out)
    out_kp = model.forward(global_orient, query_names, fwd_meshes=False)
    out_kp = jax.block_until_ready(out_kp)

    # Reference check against pure-JAX quaternion math
    obj_idx = np.array([model.obj_tensors["names"].index(n) for n in query_names])
    q_ref = _aa_to_quat_ref(global_orient)
    v_full = model.obj_tensors["v"][obj_idx]
    v_sub = model.obj_tensors["v_sub"][obj_idx]
    bbox = model.obj_tensors["bbox_bottom"][obj_idx]

    max_len = int(model.obj_tensors["v_len"][obj_idx].max())
    np.testing.assert_allclose(np.asarray(out["v"]),
                               np.asarray(_quat_apply_ref(q_ref, v_full[:, :max_len])),
                               rtol=1e-5, atol=1e-5)
    np.testing.assert_allclose(np.asarray(out["v_sub"]),
                               np.asarray(_quat_apply_ref(q_ref, v_sub)),
                               rtol=1e-5, atol=1e-5)
    np.testing.assert_allclose(np.asarray(out["bbox3d"]),
                               np.asarray(_quat_apply_ref(q_ref, bbox)),
                               rtol=1e-5, atol=1e-5)
    np.testing.assert_allclose(np.asarray(out["kp3d"]), np.asarray(out["bbox3d"]),
                               rtol=1e-6, atol=1e-6)
    np.testing.assert_allclose(np.asarray(out_kp["bbox3d"]), np.asarray(out["bbox3d"]),
                               rtol=1e-6, atol=1e-6)
    assert out["v"].shape == (B, max_len, 3)
    assert out["bbox3d"].shape == (B, N_KP, 3)
    assert out["f"].shape == (B, 96, 3)
    assert out["mask"].shape == (B, max_len)

    print("KERNEL_OK")
</pallas_src>

<mosaic_0001>
module attributes {stable_mosaic.version = 11 : i64} {
  func.func @_fused_rot_kernel(%arg0: i32, %arg1: memref<8x3xf32, #tpu.memory_space<vmem>>, %arg2: memref<8x1xi32, #tpu.memory_space<vmem>>, %arg3: memref<3x3x128xf32, #tpu.memory_space<vmem>>, %arg4: memref<3x8x128xf32, #tpu.memory_space<vmem>>) attributes {dimension_semantics = [#tpu.dimension_semantics<parallel>], iteration_bounds = array<i64: 1>, scalar_prefetch = 0 : i64, scratch_operands = 0 : i64, tpu.core_type = #tpu.core_type<tc>, window_params = [{transform_indices = @transform_0, window_bounds = array<i64: 8, 3>}, {transform_indices = @transform_1, window_bounds = array<i64: 8, 1>}, {pipeline_mode = #tpu.pipeline_mode<synchronous>, transform_indices = @transform_2, window_bounds = array<i64: 3, 3, 128>}, {transform_indices = @transform_3, window_bounds = array<i64: 3, 8, 128>}]} {
    %c0 = arith.constant 0 : index
    %c0_0 = arith.constant 0 : index
    %0 = vector.load %arg1[%c0, %c0_0] : memref<8x3xf32, #tpu.memory_space<vmem>>, vector<8x3xf32>
    %1 = vector.extract_strided_slice %0 {offsets = [0, 0], sizes = [8, 1], strides = [1, 1]} : vector<8x3xf32> to vector<8x1xf32>
    %2 = vector.extract_strided_slice %0 {offsets = [0, 1], sizes = [8, 1], strides = [1, 1]} : vector<8x3xf32> to vector<8x1xf32>
    %3 = vector.extract_strided_slice %0 {offsets = [0, 2], sizes = [8, 1], strides = [1, 1]} : vector<8x3xf32> to vector<8x1xf32>
    %4 = arith.mulf %1, %1 : vector<8x1xf32>
    %5 = arith.mulf %2, %2 : vector<8x1xf32>
    %6 = arith.addf %4, %5 : vector<8x1xf32>
    %7 = arith.mulf %3, %3 : vector<8x1xf32>
    %8 = arith.addf %6, %7 : vector<8x1xf32>
    %9 = math.sqrt %8 : vector<8x1xf32>
    %cst = arith.constant 5.000000e-01 : f32
    %10 = vector.broadcast %cst : f32 to vector<8x1xf32>
    %11 = arith.mulf %10, %9 : vector<8x1xf32>
    %cst_1 = arith.constant 9.99999997E-7 : f32
    %12 = vector.broadcast %cst_1 : f32 to vector<8x1xf32>
    %13 = arith.cmpf olt, %9, %12 : vector<8x1xf32>
    %cst_2 = arith.constant 1.000000e+00 : f32
    %14 = vector.broadcast %cst_2 : f32 to vector<8x1xf32>
    %15 = arith.select %13, %14, %9 : vector<8x1xi1>, vector<8x1xf32>
    %cst_3 = arith.constant 0.020833334 : f32
    %16 = vector.broadcast %cst_3 : f32 to vector<8x1xf32>
    %17 = arith.mulf %8, %16 : vector<8x1xf32>
    %cst_4 = arith.constant 5.000000e-01 : f32
    %18 = vector.broadcast %cst_4 : f32 to vector<8x1xf32>
    %19 = arith.subf %18, %17 : vector<8x1xf32>
    %20 = math.sin %11 : vector<8x1xf32>
    %21 = arith.divf %20, %15 : vector<8x1xf32>
    %22 = arith.select %13, %19, %21 : vector<8x1xi1>, vector<8x1xf32>
    %23 = math.cos %11 : vector<8x1xf32>
    %24 = arith.mulf %1, %22 : vector<8x1xf32>
    %25 = arith.mulf %2, %22 : vector<8x1xf32>
    %26 = arith.mulf %3, %22 : vector<8x1xf32>
    %27 = arith.mulf %24, %24 : vector<8x1xf32>
    %28 = arith.mulf %25, %25 : vector<8x1xf32>
    %29 = arith.mulf %26, %26 : vector<8x1xf32>
    %30 = arith.mulf %24, %25 : vector<8x1xf32>
    %31 = arith.mulf %24, %26 : vector<8x1xf32>
    %32 = arith.mulf %25, %26 : vector<8x1xf32>
    %33 = arith.mulf %23, %24 : vector<8x1xf32>
    %34 = arith.mulf %23, %25 : vector<8x1xf32>
    %35 = arith.mulf %23, %26 : vector<8x1xf32>
    %36 = arith.addf %28, %29 : vector<8x1xf32>
    %cst_5 = arith.constant 2.000000e+00 : f32
    %37 = vector.broadcast %cst_5 : f32 to vector<8x1xf32>
    %38 = arith.mulf %37, %36 : vector<8x1xf32>
    %cst_6 = arith.constant 1.000000e+00 : f32
    %39 = vector.broadcast %cst_6 : f32 to vector<8x1xf32>
    %40 = arith.subf %39, %38 : vector<8x1xf32>
    %41 = arith.subf %30, %35 : vector<8x1xf32>
    %cst_7 = arith.constant 2.000000e+00 : f32
    %42 = vector.broadcast %cst_7 : f32 to vector<8x1xf32>
    %43 = arith.mulf %42, %41 : vector<8x1xf32>
    %44 = arith.addf %31, %34 : vector<8x1xf32>
    %cst_8 = arith.constant 2.000000e+00 : f32
    %45 = vector.broadcast %cst_8 : f32 to vector<8x1xf32>
    %46 = arith.mulf %45, %44 : vector<8x1xf32>
    %47 = arith.addf %30, %35 : vector<8x1xf32>
    %cst_9 = arith.constant 2.000000e+00 : f32
    %48 = vector.broadcast %cst_9 : f32 to vector<8x1xf32>
    %49 = arith.mulf %48, %47 : vector<8x1xf32>
    %50 = arith.addf %27, %29 : vector<8x1xf32>
    %cst_10 = arith.constant 2.000000e+00 : f32
    %51 = vector.broadcast %cst_10 : f32 to vector<8x1xf32>
    %52 = arith.mulf %51, %50 : vector<8x1xf32>
    %cst_11 = arith.constant 1.000000e+00 : f32
    %53 = vector.broadcast %cst_11 : f32 to vector<8x1xf32>
    %54 = arith.subf %53, %52 : vector<8x1xf32>
    %55 = arith.subf %32, %33 : vector<8x1xf32>
    %cst_12 = arith.constant 2.000000e+00 : f32
    %56 = vector.broadcast %cst_12 : f32 to vector<8x1xf32>
    %57 = arith.mulf %56, %55 : vector<8x1xf32>
    %58 = arith.subf %31, %34 : vector<8x1xf32>
    %cst_13 = arith.constant 2.000000e+00 : f32
    %59 = vector.broadcast %cst_13 : f32 to vector<8x1xf32>
    %60 = arith.mulf %59, %58 : vector<8x1xf32>
    %61 = arith.addf %32, %33 : vector<8x1xf32>
    %cst_14 = arith.constant 2.000000e+00 : f32
    %62 = vector.broadcast %cst_14 : f32 to vector<8x1xf32>
    %63 = arith.mulf %62, %61 : vector<8x1xf32>
    %64 = arith.addf %27, %28 : vector<8x1xf32>
    %cst_15 = arith.constant 2.000000e+00 : f32
    %65 = vector.broadcast %cst_15 : f32 to vector<8x1xf32>
    %66 = arith.mulf %65, %64 : vector<8x1xf32>
    %cst_16 = arith.constant 1.000000e+00 : f32
    %67 = vector.broadcast %cst_16 : f32 to vector<8x1xf32>
    %68 = arith.subf %67, %66 : vector<8x1xf32>
    %c0_17 = arith.constant 0 : index
    %c0_18 = arith.constant 0 : index
    %69 = vector.load %arg2[%c0_17, %c0_18] : memref<8x1xi32, #tpu.memory_space<vmem>>, vector<8x1xi32>
    %c1_i32 = arith.constant 1 : i32
    %70 = vector.broadcast %c1_i32 : i32 to vector<8x1xi32>
    %71 = arith.cmpi eq, %69, %70 : vector<8x1xi32>
    %72 = vector.shape_cast %71 : vector<8x1xi1> to vector<8x1xi1>
    %73 = vector.broadcast %72 : vector<8x1xi1> to vector<8x128xi1>
    %c2_i32 = arith.constant 2 : i32
    %74 = vector.broadcast %c2_i32 : i32 to vector<8x1xi32>
    %75 = arith.cmpi eq, %69, %74 : vector<8x1xi32>
    %76 = vector.shape_cast %75 : vector<8x1xi1> to vector<8x1xi1>
    %77 = vector.broadcast %76 : vector<8x1xi1> to vector<8x128xi1>
    %c0_19 = arith.constant 0 : index
    %c0_20 = arith.constant 0 : index
    %c0_21 = arith.constant 0 : index
    %78 = vector.load %arg3[%c0_19, %c0_20, %c0_21] : memref<3x3x128xf32, #tpu.memory_space<vmem>>, vector<1x1x128xf32>
    %79 = vector.shape_cast %78 : vector<1x1x128xf32> to vector<1x128xf32>
    %80 = vector.shape_cast %79 : vector<1x128xf32> to vector<1x128xf32>
    %81 = vector.broadcast %80 : vector<1x128xf32> to vector<8x128xf32>
    %c0_22 = arith.constant 0 : index
    %c1 = arith.constant 1 : index
    %c0_23 = arith.constant 0 : index
    %82 = vector.load %arg3[%c0_22, %c1, %c0_23] : memref<3x3x128xf32, #tpu.memory_space<vmem>>, vector<1x1x128xf32>
    %83 = vector.shape_cast %82 : vector<1x1x128xf32> to vector<1x128xf32>
    %84 = vector.shape_cast %83 : vector<1x128xf32> to vector<1x128xf32>
    %85 = vector.broadcast %84 : vector<1x128xf32> to vector<8x128xf32>
    %86 = arith.select %73, %85, %81 : vector<8x128xi1>, vector<8x128xf32>
    %c0_24 = arith.constant 0 : index
    %c2 = arith.constant 2 : index
    %c0_25 = arith.constant 0 : index
    %87 = vector.load %arg3[%c0_24, %c2, %c0_25] : memref<3x3x128xf32, #tpu.memory_space<vmem>>, vector<1x1x128xf32>
    %88 = vector.shape_cast %87 : vector<1x1x128xf32> to vector<1x128xf32>
    %89 = vector.shape_cast %88 : vector<1x128xf32> to vector<1x128xf32>
    %90 = vector.broadcast %89 : vector<1x128xf32> to vector<8x128xf32>
    %91 = arith.select %77, %90, %86 : vector<8x128xi1>, vector<8x128xf32>
    %c1_26 = arith.constant 1 : index
    %c0_27 = arith.constant 0 : index
    %c0_28 = arith.constant 0 : index
    %92 = vector.load %arg3[%c1_26, %c0_27, %c0_28] : memref<3x3x128xf32, #tpu.memory_space<vmem>>, vector<1x1x128xf32>
    %93 = vector.shape_cast %92 : vector<1x1x128xf32> to vector<1x128xf32>
    %94 = vector.shape_cast %93 : vector<1x128xf32> to vector<1x128xf32>
    %95 = vector.broadcast %94 : vector<1x128xf32> to vector<8x128xf32>
    %c1_29 = arith.constant 1 : index
    %c1_30 = arith.constant 1 : index
    %c0_31 = arith.constant 0 : index
    %96 = vector.load %arg3[%c1_29, %c1_30, %c0_31] : memref<3x3x128xf32, #tpu.memory_space<vmem>>, vector<1x1x128xf32>
    %97 = vector.shape_cast %96 : vector<1x1x128xf32> to vector<1x128xf32>
    %98 = vector.shape_cast %97 : vector<1x128xf32> to vector<1x128xf32>
    %99 = vector.broadcast %98 : vector<1x128xf32> to vector<8x128xf32>
    %100 = arith.select %73, %99, %95 : vector<8x128xi1>, vector<8x128xf32>
    %c1_32 = arith.constant 1 : index
    %c2_33 = arith.constant 2 : index
    %c0_34 = arith.constant 0 : index
    %101 = vector.load %arg3[%c1_32, %c2_33, %c0_34] : memref<3x3x128xf32, #tpu.memory_space<vmem>>, vector<1x1x128xf32>
    %102 = vector.shape_cast %101 : vector<1x1x128xf32> to vector<1x128xf32>
    %103 = vector.shape_cast %102 : vector<1x128xf32> to vector<1x128xf32>
    %104 = vector.broadcast %103 : vector<1x128xf32> to vector<8x128xf32>
    %105 = arith.select %77, %104, %100 : vector<8x128xi1>, vector<8x128xf32>
    %c2_35 = arith.constant 2 : index
    %c0_36 = arith.constant 0 : index
    %c0_37 = arith.constant 0 : index
    %106 = vector.load %arg3[%c2_35, %c0_36, %c0_37] : memref<3x3x128xf32, #tpu.memory_space<vmem>>, vector<1x1x128xf32>
    %107 = vector.shape_cast %106 : vector<1x1x128xf32> to vector<1x128xf32>
    %108 = vector.shape_cast %107 : vector<1x128xf32> to vector<1x128xf32>
    %109 = vector.broadcast %108 : vector<1x128xf32> to vector<8x128xf32>
    %c2_38 = arith.constant 2 : index
    %c1_39 = arith.constant 1 : index
    %c0_40 = arith.constant 0 : index
    %110 = vector.load %arg3[%c2_38, %c1_39, %c0_40] : memref<3x3x128xf32, #tpu.memory_space<vmem>>, vector<1x1x128xf32>
    %111 = vector.shape_cast %110 : vector<1x1x128xf32> to vector<1x128xf32>
    %112 = vector.shape_cast %111 : vector<1x128xf32> to vector<1x128xf32>
    %113 = vector.broadcast %112 : vector<1x128xf32> to vector<8x128xf32>
    %114 = arith.select %73, %113, %109 : vector<8x128xi1>, vector<8x128xf32>
    %c2_41 = arith.constant 2 : index
    %c2_42 = arith.constant 2 : index
    %c0_43 = arith.constant 0 : index
    %115 = vector.load %arg3[%c2_41, %c2_42, %c0_43] : memref<3x3x128xf32, #tpu.memory_space<vmem>>, vector<1x1x128xf32>
    %116 = vector.shape_cast %115 : vector<1x1x128xf32> to vector<1x128xf32>
    %117 = vector.shape_cast %116 : vector<1x128xf32> to vector<1x128xf32>
    %118 = vector.broadcast %117 : vector<1x128xf32> to vector<8x128xf32>
    %119 = arith.select %77, %118, %114 : vector<8x128xi1>, vector<8x128xf32>
    %120 = vector.broadcast %40 : vector<8x1xf32> to vector<8x128xf32>
    %121 = arith.mulf %120, %91 : vector<8x128xf32>
    %122 = vector.broadcast %43 : vector<8x1xf32> to vector<8x128xf32>
    %123 = arith.mulf %122, %105 : vector<8x128xf32>
    %124 = arith.addf %121, %123 : vector<8x128xf32>
    %125 = vector.broadcast %46 : vector<8x1xf32> to vector<8x128xf32>
    %126 = arith.mulf %125, %119 : vector<8x128xf32>
    %127 = arith.addf %124, %126 : vector<8x128xf32>
    %c0_44 = arith.constant 0 : index
    %c0_45 = arith.constant 0 : index
    %c0_46 = arith.constant 0 : index
    %128 = vector.load %arg4[%c0_44, %c0_45, %c0_46] : memref<3x8x128xf32, #tpu.memory_space<vmem>>, vector<1x8x128xf32>
    %129 = vector.shape_cast %128 : vector<1x8x128xf32> to vector<8x128xf32>
    %130 = vector.shape_cast %127 : vector<8x128xf32> to vector<1x8x128xf32>
    tpu.vector_store %arg4[%c0_44, %c0_45, %c0_46], %130 {strides = array<i32>} : memref<3x8x128xf32, #tpu.memory_space<vmem>>, vector<1x8x128xf32>,
    %131 = vector.broadcast %49 : vector<8x1xf32> to vector<8x128xf32>
    %132 = arith.mulf %131, %91 : vector<8x128xf32>
    %133 = vector.broadcast %54 : vector<8x1xf32> to vector<8x128xf32>
    %134 = arith.mulf %133, %105 : vector<8x128xf32>
    %135 = arith.addf %132, %134 : vector<8x128xf32>
    %136 = vector.broadcast %57 : vector<8x1xf32> to vector<8x128xf32>
    %137 = arith.mulf %136, %119 : vector<8x128xf32>
    %138 = arith.addf %135, %137 : vector<8x128xf32>
    %c1_47 = arith.constant 1 : index
    %c0_48 = arith.constant 0 : index
    %c0_49 = arith.constant 0 : index
    %139 = vector.load %arg4[%c1_47, %c0_48, %c0_49] : memref<3x8x128xf32, #tpu.memory_space<vmem>>, vector<1x8x128xf32>
    %140 = vector.shape_cast %139 : vector<1x8x128xf32> to vector<8x128xf32>
    %141 = vector.shape_cast %138 : vector<8x128xf32> to vector<1x8x128xf32>
    tpu.vector_store %arg4[%c1_47, %c0_48, %c0_49], %141 {strides = array<i32>} : memref<3x8x128xf32, #tpu.memory_space<vmem>>, vector<1x8x128xf32>,
    %142 = vector.broadcast %60 : vector<8x1xf32> to vector<8x128xf32>
    %143 = arith.mulf %142, %91 : vector<8x128xf32>
    %144 = vector.broadcast %63 : vector<8x1xf32> to vector<8x128xf32>
    %145 = arith.mulf %144, %105 : vector<8x128xf32>
    %146 = arith.addf %143, %145 : vector<8x128xf32>
    %147 = vector.broadcast %68 : vector<8x1xf32> to vector<8x128xf32>
    %148 = arith.mulf %147, %119 : vector<8x128xf32>
    %149 = arith.addf %146, %148 : vector<8x128xf32>
    %c2_50 = arith.constant 2 : index
    %c0_51 = arith.constant 0 : index
    %c0_52 = arith.constant 0 : index
    %150 = vector.load %arg4[%c2_50, %c0_51, %c0_52] : memref<3x8x128xf32, #tpu.memory_space<vmem>>, vector<1x8x128xf32>
    %151 = vector.shape_cast %150 : vector<1x8x128xf32> to vector<8x128xf32>
    %152 = vector.shape_cast %149 : vector<8x128xf32> to vector<1x8x128xf32>
    tpu.vector_store %arg4[%c2_50, %c0_51, %c0_52], %152 {strides = array<i32>} : memref<3x8x128xf32, #tpu.memory_space<vmem>>, vector<1x8x128xf32>,
    return
  }
  func.func @transform_0(%arg0: i32) -> (i32, i32) {
    %c0_i32 = arith.constant 0 : i32
    %c0_i32_0 = arith.constant 0 : i32
    return %arg0, %c0_i32 : i32, i32
  }
  func.func @transform_1(%arg0: i32) -> (i32, i32) {
    %c0_i32 = arith.constant 0 : i32
    %c0_i32_0 = arith.constant 0 : i32
    return %arg0, %c0_i32 : i32, i32
  }
  func.func @transform_2(%arg0: i32) -> (i32, i32, i32) {
    %c0_i32 = arith.constant 0 : i32
    %c0_i32_0 = arith.constant 0 : i32
    %c0_i32_1 = arith.constant 0 : i32
    %c0_i32_2 = arith.constant 0 : i32
    return %c0_i32, %c0_i32_0, %c0_i32_1 : i32, i32, i32
  }
  func.func @transform_3(%arg0: i32) -> (i32, i32, i32) {
    %c0_i32 = arith.constant 0 : i32
    %c0_i32_0 = arith.constant 0 : i32
    %c0_i32_1 = arith.constant 0 : i32
    return %c0_i32, %arg0, %c0_i32_0 : i32, i32, i32
  }
}

</mosaic_0001>

<llo_original>
// kernel: _forward_impl.1
$region0: #{_forward_impl.1}
  #allocation0 [shape = 'u32[]', space=smem, size = 0x4, offset = 0x4, fixed_abs, tag = 'smem constant byte address 0x4 - core index']
  #allocation1 [shape = 'u32[144,128]{1,0:T(1,128)}', space=vmem, size = 0x12000, scoped, tag = 'internal scratch']
  %s0 = inlined_call_operand.vmem [shape: f32[8,3], index: 0, kind: input, shape index: {}]
  %s1 = inlined_call_operand.vmem [shape: s32[8,1], index: 1, kind: input, shape index: {}]
  %s2 = inlined_call_operand.vmem [shape: f32[3,3,128], index: 2, kind: input, shape index: {}]
  %s3 = inlined_call_operand.vmem [shape: f32[3,8,128], index: 3, kind: output, shape index: {}]
  %s4 = sld [smem:[#allocation0]]
  $region22: #{_forward_impl.1} parent=0
    _
  %s6 = ssub.s32 1, %s4
  %s7 = scalar_select 0, %s6, %s4
  // Predicated region
  $region2: #{_forward_impl.1} parent=0 // pred_check
    _
  $region3: #{_forward_impl.1} parent=0 // pred_check_branch
    %9 = sbr.rel (0) target = $region5
  $region4: #{_forward_impl.1} parent=0 // pred_region
    _
  $region5: #{_forward_impl.1} parent=0 // pred_fallthru
    _
  // Predicated region
  $region6: #{_forward_impl.1} parent=0 // pred_check
    _
  $region7: #{_forward_impl.1} parent=0 // pred_check_branch
    %11 = sbr.rel (0) target = $region9
  $region8: #{_forward_impl.1} parent=0 // pred_region
    _
  $region9: #{_forward_impl.1} parent=0 // pred_fallthru
    _
  // Predicated region
  $region10: #{_forward_impl.1} parent=0 // pred_check
    _
  $region11: #{_forward_impl.1} parent=0 // pred_check_branch
    %13 = sbr.rel (0) target = $region13
  $region12: #{_forward_impl.1} parent=0 // pred_region
    _
  $region13: #{_forward_impl.1} parent=0 // pred_fallthru
    _
  %v14 = vld [vmem:[%s0] sm:$0xff]
  %v15 = vmul.f32 %v14, %v14
  %17 = vrot.lane.b32.xlu0 %v15, 127
  %v18 = vpop.permute.xlu0 %17
  %v20 = vadd.f32 %v15, %v18
  %21 = vrot.lane.b32.xlu0 %v15, 126
  %v22 = vpop.permute.xlu0 %21
  %v24 = vadd.f32 %v20, %v22
  %v25 = vrsqrt.pop %v24
  %v26 = vmul.f32 %v24, %v25
  %vm27 = vcmp.eq.f32.partialorder %v24, inf
  %v28 = vsel %vm27, %v24, %v26
  %vm29 = vcmp.eq.f32.partialorder %v24, 0.0
  %v30 = vand.u32 %v24, 2147483648
  %v31 = vsel %vm29, %v30, %v28
  %v32 = vmul.f32 %v31, 0.5
  %vm33 = vcmp.lt.f32.partialorder %v31, 1e-06
  %v34 = vsel %vm33, 1.0, %v31
  %v35 = vmul.f32 %v24, 0.020833334
  %v36 = vsub.f32 0.5, %v35
  %v37 = vand.u32 2147483647, %v32
  %vm38 = vcmp.le.f32.partialorder %v37, 0.7853982
  %vm39 = vcmp.lt.s32.totalorder %v32, 0
  %v40 = vand.u32 %v32, 2139095040
  %v41 = vshrl.u32 %v40, 23
  %v42 = vsub.s32 %v41, 127
  %v43 = vand.u32 2147483647, %v32
  %v44 = vand.u32 %v43, 8388607
  %v45 = vor.u32 %v44, 8388608
  %v46 = vsub.s32 0, %v45
  %v47 = vadd.s32 %v42, 1
  %vm48 = vcmp.gt.s32.totalorder %v47, 0
  %v49 = vsel %vm48, %v47, 0
  %v50 = vshrl.u32 %v49, 5
  %v51 = vand.u32 %v49, 31
  %v52 = vsub.s32 32, %v51
  %v53 = vshrl.u32 683565275, %v52
  %v54 = vshll.u32 683565275, %v51
  %v55 = vshrl.u32 2475754826, %v52
  %v56 = vor.u32 %v54, %v55
  %v57 = vshll.u32 2475754826, %v51
  %v58 = vshrl.u32 2131351028, %v52
  %v59 = vor.u32 %v57, %v58
  %v60 = vshll.u32 2131351028, %v51
  %v61 = vshrl.u32 2102212464, %v52
  %v62 = vor.u32 %v60, %v61
  %v63 = vshll.u32 2102212464, %v51
  %v64 = vshrl.u32 920167782, %v52
  %v65 = vor.u32 %v63, %v64
  %v66 = vshll.u32 920167782, %v51
  %v67 = vshrl.u32 1326507024, %v52
  %v68 = vor.u32 %v66, %v67
  %vm69 = vcmp.lt.s32.totalorder %v50, 1
  %vm70 = vcmp.lt.s32.totalorder %v50, 2
  %vm71 = vcmp.lt.s32.totalorder %v50, 3
  %vm72 = vcmp.lt.s32.totalorder %v50, 4
  %v73 = vsel %vm69, %v53, %v56
  %v74 = vsel %vm72, %v62, 2102212464
  %v75 = vsel %vm71, %v59, %v74
  %v76 = vsel %vm70, %v73, %v75
  %v77 = vsel %vm69, %v56, %v59
  %v78 = vsel %vm72, %v65, 920167782
  %v79 = vsel %vm71, %v62, %v78
  %v80 = vsel %vm70, %v77, %v79
  %v81 = vsel %vm69, %v59, %v62
  %v82 = vsel %vm72, %v68, 1326507024
  %v83 = vsel %vm71, %v65, %v82
  %v84 = vsel %vm70, %v81, %v83
  %v85 = vshll.u32 %v45, 8
  %v86 = vmul.u32.u64.compose %v85, %v84
  %v87 = vextract.low.u32 %v86
  %v88 = vextract.high.u32 %v86
  %v89 = vmul.u32.u64.compose %v85, %v80
  %v90 = vextract.low.u32 %v89
  %v91 = vextract.high.u32 %v89
  %v92 = vmul.u32 %v85, %v76
  %v93 = vadd.s32 %v88, %v90
  %vm94 = vc.u32 %v88, %v90
  %v95 = vadd.s32 %v91, 1
  %v96 = vsel %vm94, %v95, %v91
  %v97 = vadd.s32 %v92, %v96
  %v98 = vadd.s32 %v97, 536870912
  %v99 = vshrl.u32 %v98, 30
  %v100 = vshll.u32 %v99, 30
  %v101 = vsub.s32 %v97, %v100
  %vm102 = vcmp.lt.s32.totalorder %v101, 0
  %v103 = vsub.s32 0, %v101
  %v104 = vsel %vm102, %v103, %v101
  %v105 = vclz %v104
  %v106 = vsub.s32 %v105, 2
  %vm107 = vcmp.gt.s32.totalorder 0, %v106
  %v108 = vsel %vm107, 0, %v106
  %v109 = vsub.s32 32, %v108
  %v110 = vshll.u32 %v101, %v108
  %v111 = vshrl.u32 %v93, %v109
  %v112 = vor.u32 %v110, %v111
  %v113 = vsub.s32 4294967266, %v108
  %v114 = vadd.s32 %v113, 127
  %v115 = vshll.u32 %v114, 23
  %v116 = vor.u32 4788187, %v115
  %v117 = vand.u32 2147483647, %v116
  %v119 = vcvt.s32.f32 %v112
  %v120 = vmul.f32 %v119, %v117
  %v121 = vxor.u32 %v120, 2147483648
  %v122 = vsel %vm39, %v121, %v120
  %v123 = vsub.s32 4, %v99
  %v124 = vsel %vm39, %v123, %v99
  %v125 = vsel %vm38, %v32, %v122
  %v126 = vsel %vm38, 0, %v124
  %v127 = vcosq.f32.pop %v125
  %v128 = vsinq.f32.pop %v125
  %vm129 = vweird.f32 %v32
  %v130 = vadd.s32 %v126, 3
  %v131 = vand.u32 %v130, 3
  %vm132 = vcmp.lt.s32.totalorder %v131, 2
  %vm133 = vcmp.eq.s32.totalorder %v131, 0
  %v134 = vxor.u32 %v128, 2147483648
  %v135 = vsel %vm133, %v127, %v134
  %vm136 = vcmp.eq.s32.totalorder %v131, 2
  %v137 = vxor.u32 %v127, 2147483648
  %v138 = vsel %vm136, %v137, %v128
  %v139 = vsel %vm132, %v135, %v138
  %v140 = vsel %vm129, nan, %v139
  %v141 = vrcp.pop %v34
  %v142 = vmul.f32 %v140, %v141
  %v143 = vsel %vm33, %v36, %v142
  %v144 = vand.u32 2147483647, %v32
  %vm145 = vcmp.le.f32.partialorder %v144, 0.7853982
  %vm146 = vcmp.lt.s32.totalorder %v32, 0
  %v147 = vand.u32 %v32, 2139095040
  %v148 = vshrl.u32 %v147, 23
  %v149 = vsub.s32 %v148, 127
  %v150 = vand.u32 2147483647, %v32
  %v151 = vand.u32 %v150, 8388607
  %v152 = vor.u32 %v151, 8388608
  %v153 = vsub.s32 0, %v152
  %v154 = vadd.s32 %v149, 1
  %vm155 = vcmp.gt.s32.totalorder %v154, 0
  %v156 = vsel %vm155, %v154, 0
  %v157 = vshrl.u32 %v156, 5
  %v158 = vand.u32 %v156, 31
  %v159 = vsub.s32 32, %v158
  %v160 = vshrl.u32 683565275, %v159
  %v161 = vshll.u32 683565275, %v158
  %v162 = vshrl.u32 2475754826, %v159
  %v163 = vor.u32 %v161, %v162
  %v164 = vshll.u32 2475754826, %v158
  %v165 = vshrl.u32 2131351028, %v159
  %v166 = vor.u32 %v164, %v165
  %v167 = vshll.u32 2131351028, %v158
  %v168 = vshrl.u32 2102212464, %v159
  %v169 = vor.u32 %v167, %v168
  %v170 = vshll.u32 2102212464, %v158
  %v171 = vshrl.u32 920167782, %v159
  %v172 = vor.u32 %v170, %v171
  %v173 = vshll.u32 920167782, %v158
  %v174 = vshrl.u32 1326507024, %v159
  %v175 = vor.u32 %v173, %v174
  %vm176 = vcmp.lt.s32.totalorder %v157, 1
  %vm177 = vcmp.lt.s32.totalorder %v157, 2
  %vm178 = vcmp.lt.s32.totalorder %v157, 3
  %vm179 = vcmp.lt.s32.totalorder %v157, 4
  %v180 = vsel %vm176, %v160, %v163
  %v181 = vsel %vm179, %v169, 2102212464
  %v182 = vsel %vm178, %v166, %v181
  %v183 = vsel %vm177, %v180, %v182
  %v184 = vsel %vm176, %v163, %v166
  %v185 = vsel %vm179, %v172, 920167782
  %v186 = vsel %vm178, %v169, %v185
  %v187 = vsel %vm177, %v184, %v186
  %v188 = vsel %vm176, %v166, %v169
  %v189 = vsel %vm179, %v175, 1326507024
  %v190 = vsel %vm178, %v172, %v189
  %v191 = vsel %vm177, %v188, %v190
  %v192 = vshll.u32 %v152, 8
  %v193 = vmul.u32.u64.compose %v192, %v191
  %v194 = vextract.low.u32 %v193
  %v195 = vextract.high.u32 %v193
  %v196 = vmul.u32.u64.compose %v192, %v187
  %v197 = vextract.low.u32 %v196
  %v198 = vextract.high.u32 %v196
  %v199 = vmul.u32 %v192, %v183
  %v200 = vadd.s32 %v195, %v197
  %vm201 = vc.u32 %v195, %v197
  %v202 = vadd.s32 %v198, 1
  %v203 = vsel %vm201, %v202, %v198
  %v204 = vadd.s32 %v199, %v203
  %v205 = vadd.s32 %v204, 536870912
  %v206 = vshrl.u32 %v205, 30
  %v207 = vshll.u32 %v206, 30
  %v208 = vsub.s32 %v204, %v207
  %vm209 = vcmp.lt.s32.totalorder %v208, 0
  %v210 = vsub.s32 0, %v208
  %v211 = vsel %vm209, %v210, %v208
  %v212 = vclz %v211
  %v213 = vsub.s32 %v212, 2
  %vm214 = vcmp.gt.s32.totalorder 0, %v213
  %v215 = vsel %vm214, 0, %v213
  %v216 = vsub.s32 32, %v215
  %v217 = vshll.u32 %v208, %v215
  %v218 = vshrl.u32 %v200, %v216
  %v219 = vor.u32 %v217, %v218
  %v220 = vsub.s32 4294967266, %v215
  %v221 = vadd.s32 %v220, 127
  %v222 = vshll.u32 %v221, 23
  %v223 = vor.u32 4788187, %v222
  %v224 = vand.u32 2147483647, %v223
  %v226 = vcvt.s32.f32 %v219
  %v227 = vmul.f32 %v226, %v224
  %v228 = vxor.u32 %v227, 2147483648
  %v229 = vsel %vm146, %v228, %v227
  %v230 = vsub.s32 4, %v206
  %v231 = vsel %vm146, %v230, %v206
  %v232 = vsel %vm145, %v32, %v229
  %v233 = vsel %vm145, 0, %v231
  %v234 = vcosq.f32.pop %v232
  %v235 = vsinq.f32.pop %v232
  %vm236 = vweird.f32 %v32
  %v237 = vand.u32 %v233, 3
  %vm238 = vcmp.lt.s32.totalorder %v237, 2
  %vm239 = vcmp.eq.s32.totalorder %v237, 0
  %v240 = vxor.u32 %v235, 2147483648
  %v241 = vsel %vm239, %v234, %v240
  %vm242 = vcmp.eq.s32.totalorder %v237, 2
  %v243 = vxor.u32 %v234, 2147483648
  %v244 = vsel %vm242, %v243, %v235
  %v245 = vsel %vm238, %v241, %v244
  %v246 = vsel %vm236, nan, %v245
  %v247 = vmul.f32 %v14, %v143
  %249 = vrot.lane.b32.xlu0 %v143, 1
  %v250 = vpop.permute.xlu0 %249
  %v252 = vmul.f32 %v14, %v250
  %253 = vrot.lane.b32.xlu0 %v143, 2
  %v254 = vpop.permute.xlu0 %253
  %v256 = vmul.f32 %v14, %v254
  %v257 = vmul.f32 %v247, %v247
  %v258 = vmul.f32 %v252, %v252
  %v259 = vmul.f32 %v256, %v256
  %261 = vrot.lane.b32.xlu0 %v252, 127
  %v262 = vpop.permute.xlu0 %261
  %v264 = vmul.f32 %v247, %v262
  %266 = vrot.lane.b32.xlu0 %v256, 126
  %v267 = vpop.permute.xlu0 %266
  %v269 = vmul.f32 %v247, %v267
  %270 = vrot.lane.b32.xlu0 %v256, 127
  %v271 = vpop.permute.xlu0 %270
  %v273 = vmul.f32 %v252, %v271
  %v274 = vmul.f32 %v246, %v247
  %v275 = vmul.f32 %v246, %v262
  %v276 = vmul.f32 %v246, %v267
  %278 = vrot.lane.b32.xlu0 %v259, 127
  %v279 = vpop.permute.xlu0 %278
  %v281 = vadd.f32 %v258, %v279
  %v282 = vmul.f32 %v281, 2.0
  %v283 = vsub.f32 1.0, %v282
  %v284 = vsub.f32 %v264, %v276
  %v285 = vmul.f32 %v284, 2.0
  %v286 = vadd.f32 %v269, %v275
  %v287 = vmul.f32 %v286, 2.0
  %v288 = vadd.f32 %v264, %v276
  %v289 = vmul.f32 %v288, 2.0
  %290 = vrot.lane.b32.xlu0 %v259, 126
  %v291 = vpop.permute.xlu0 %290
  %v293 = vadd.f32 %v257, %v291
  %v294 = vmul.f32 %v293, 2.0
  %v295 = vsub.f32 1.0, %v294
  %297 = vrot.lane.b32.xlu0 %v274, 1
  %v298 = vpop.permute.xlu0 %297
  %v300 = vsub.f32 %v273, %v298
  %v301 = vmul.f32 %v300, 2.0
  %v302 = vsub.f32 %v269, %v275
  %v303 = vmul.f32 %v302, 2.0
  %v304 = vadd.f32 %v273, %v298
  %v305 = vmul.f32 %v304, 2.0
  %307 = vrot.lane.b32.xlu0 %v258, 127
  %v308 = vpop.permute.xlu0 %307
  %v310 = vadd.f32 %v257, %v308
  %v311 = vmul.f32 %v310, 2.0
  %v312 = vsub.f32 1.0, %v311
  %v313 = vld [vmem:[%s1] sm:$0xff]
  %vm314 = vcmp.eq.s32.totalorder %v313, 1
  %v315 = vsel %vm314, 1, 0
  %316 = vset.pattern.permute.xlu0 0
  %317 = vperm.xlu0 %316, %v315
  %v318 = vpop.permute.xlu0 %317
  %vm319 = vcmp.eq.s32.totalorder %v318, 1
  %vm320 = vcmp.eq.s32.totalorder %v313, 2
  %v321 = vsel %vm320, 1, 0
  %322 = vset.pattern.permute.xlu0 0
  %323 = vperm.xlu0 %322, %v321
  %v324 = vpop.permute.xlu0 %323
  %vm325 = vcmp.eq.s32.totalorder %v324, 1
  %v326 = vld [vmem:[%s2] sm:$0x1]
  %v327 = vlaneseq
  %v328 = vshrl.u32 %v327, 7
  %v329 = vsub.s32 0, %v328
  %v330 = vrot.slane %v326, %v329
  %v331 = vld [vmem:[%s2 + $0x1] sm:$0x1]
  %v332 = vlaneseq
  %v333 = vshrl.u32 %v332, 7
  %v334 = vsub.s32 0, %v333
  %v335 = vrot.slane %v331, %v334
  %v336 = vsel %vm319, %v335, %v330
  %v337 = vld [vmem:[%s2 + $0x2] sm:$0x1]
  %v338 = vlaneseq
  %v339 = vshrl.u32 %v338, 7
  %v340 = vsub.s32 0, %v339
  %v341 = vrot.slane %v337, %v340
  %v342 = vsel %vm325, %v341, %v336
  %s343 = scalar_lea.vmem %s2, 4
  %v344 = vld [vmem:[%s343] sm:$0x1]
  %v345 = vlaneseq
  %v346 = vshrl.u32 %v345, 7
  %v347 = vsub.s32 0, %v346
  %v348 = vrot.slane %v344, %v347
  %v349 = vld [vmem:[%s343 + $0x1] sm:$0x1]
  %v350 = vlaneseq
  %v351 = vshrl.u32 %v350, 7
  %v352 = vsub.s32 0, %v351
  %v353 = vrot.slane %v349, %v352
  %v354 = vsel %vm319, %v353, %v348
  %v355 = vld [vmem:[%s343 + $0x2] sm:$0x1]
  %v356 = vlaneseq
  %v357 = vshrl.u32 %v356, 7
  %v358 = vsub.s32 0, %v357
  %v359 = vrot.slane %v355, %v358
  %v360 = vsel %vm325, %v359, %v354
  %s361 = scalar_lea.vmem %s2, 8
  %v362 = vld [vmem:[%s361] sm:$0x1]
  %v363 = vlaneseq
  %v364 = vshrl.u32 %v363, 7
  %v365 = vsub.s32 0, %v364
  %v366 = vrot.slane %v362, %v365
  %v367 = vld [vmem:[%s361 + $0x1] sm:$0x1]
  %v368 = vlaneseq
  %v369 = vshrl.u32 %v368, 7
  %v370 = vsub.s32 0, %v369
  %v371 = vrot.slane %v367, %v370
  %v372 = vsel %vm319, %v371, %v366
  %v373 = vld [vmem:[%s361 + $0x2] sm:$0x1]
  %v374 = vlaneseq
  %v375 = vshrl.u32 %v374, 7
  %v376 = vsub.s32 0, %v375
  %v377 = vrot.slane %v373, %v376
  %v378 = vsel %vm325, %v377, %v372
  %380 = vset.pattern.permute.xlu0 1
  %381 = vperm.xlu0 %380, %v283
  %v382 = vpop.permute.xlu0 %381
  %v384 = vmul.f32 %v382, %v342
  %386 = vset.pattern.permute.xlu0 0
  %387 = vperm.xlu0 %386, %v285
  %v388 = vpop.permute.xlu0 %387
  %v390 = vmul.f32 %v388, %v360
  %v391 = vadd.f32 %v384, %v390
  %393 = vset.pattern.permute.xlu0 0
  %394 = vperm.xlu0 %393, %v287
  %v395 = vpop.permute.xlu0 %394
  %v397 = vmul.f32 %v395, %v378
  %v398 = vadd.f32 %v391, %v397
  %399 = vst [vmem:[%s3] sm:$0xff] %v398
  %401 = vset.pattern.permute.xlu0 0
  %402 = vperm.xlu0 %401, %v289
  %v403 = vpop.permute.xlu0 %402
  %v405 = vmul.f32 %v403, %v342
  %407 = vset.pattern.permute.xlu0 0
  %408 = vperm.xlu0 %407, %v295
  %v409 = vpop.permute.xlu0 %408
  %v411 = vmul.f32 %v409, %v360
  %v412 = vadd.f32 %v405, %v411
  %414 = vset.pattern.permute.xlu0 1
  %415 = vperm.xlu0 %414, %v301
  %v416 = vpop.permute.xlu0 %415
  %v418 = vmul.f32 %v416, %v378
  %v419 = vadd.f32 %v412, %v418
  %s420 = scalar_lea.vmem %s3, 8
  %421 = vst [vmem:[%s420] sm:$0xff] %v419
  %423 = vset.pattern.permute.xlu0 0
  %424 = vperm.xlu0 %423, %v303
  %v425 = vpop.permute.xlu0 %424
  %v427 = vmul.f32 %v425, %v342
  %429 = vset.pattern.permute.xlu0 1
  %430 = vperm.xlu0 %429, %v305
  %v431 = vpop.permute.xlu0 %430
  %v433 = vmul.f32 %v431, %v360
  %v434 = vadd.f32 %v427, %v433
  %436 = vset.pattern.permute.xlu0 0
  %437 = vperm.xlu0 %436, %v312
  %v438 = vpop.permute.xlu0 %437
  %v440 = vmul.f32 %v438, %v378
  %v441 = vadd.f32 %v434, %v440
  %s442 = scalar_lea.vmem %s3, 16
  %443 = vst [vmem:[%s442] sm:$0xff] %v441
  // Predicated region
  $region14: #{_forward_impl.1} parent=0 // pred_check
    _
  $region15: #{_forward_impl.1} parent=0 // pred_check_branch
    %445 = sbr.rel (0) target = $region17
  $region16: #{_forward_impl.1} parent=0 // pred_region
    _
  $region17: #{_forward_impl.1} parent=0 // pred_fallthru
    _
  // Predicated region
  $region18: #{_forward_impl.1} parent=0 // pred_check
    _
  $region19: #{_forward_impl.1} parent=0 // pred_check_branch
    %447 = sbr.rel (0) target = $region21
  $region20: #{_forward_impl.1} parent=0 // pred_region
    _
  $region21: #{_forward_impl.1} parent=0 // pred_fallthru
    _

</llo_original>
